<compile_context>
chip_gen: v7x
topology: tpu7x:2x2x1
jax: 0.10.0
libtpu: 0.0.40
codegen_flags: <defaults>
</compile_context>

<pallas_src>
import functools

import jax
import jax.numpy as jnp
from jax.experimental import pallas as pl
from jax.experimental.pallas import tpu as pltpu


_ACC_BASE = 8192  # lane width of the resident accumulators / unrolled add chunk


def _ls_ce_kernel(logits_ref, label_ref, out_ref, acc_sum, acc_cnt, *,
                  lb_pos, lb_neg, ignore_index, hw, tile_pix, tiles_per_chunk,
                  acc_w):
    c = pl.program_id(1)   # pixel super-chunk (parallel; feeds v7x megacore)
    t = pl.program_id(2)   # pixel tile within the chunk (reduction axis)

    @pl.when(t == 0)
    def _():
        acc_sum[...] = jnp.zeros_like(acc_sum)
        acc_cnt[...] = jnp.zeros_like(acc_cnt)

    # Logical column index of every lane, computed from the UNclamped tile
    # index so clamped / overhanging blocks are fully masked out.
    col = (jax.lax.broadcasted_iota(jnp.int32, (1, tile_pix), 1)
           + (c * tiles_per_chunk + t) * tile_pix)
    in_range = col < hw                                        # (1, TP)

    # Upcast in-kernel; zero the ragged tail so max/exp never see stale VMEM.
    x = jnp.where(in_range, logits_ref[0].astype(jnp.float32), 0.0)   # (C, TP)

    lab = label_ref[0].astype(jnp.int32)                       # (1, TP)
    ignore = lab == ignore_index
    valid = jnp.logical_and(in_range, jnp.logical_not(ignore))
    lab_c = jnp.where(ignore, 0, lab)

    # Pieces of a numerically-stable log_softmax over the class (sublane) axis.
    m = jnp.max(x, axis=0, keepdims=True)                      # (1, TP)
    z = x - m                                                  # (C, TP)
    lse = jnp.log(jnp.sum(jnp.exp(z), axis=0, keepdims=True))  # (1, TP)
    sum_z = jnp.sum(z, axis=0, keepdims=True)                  # (1, TP)
    cls = jax.lax.broadcasted_iota(jnp.int32, (z.shape[0], 1), 0)   # (C, 1)
    z_lab = jnp.sum(jnp.where(cls == lab_c, z, 0.0), axis=0, keepdims=True)

    # Algebraic fold of -sum_c(log_softmax * smoothed_target):
    #   loss = (1 - lb_neg)*lse - lb_neg*sum_c(z) - (lb_pos - lb_neg)*z[label]
    loss = (1.0 - lb_neg) * lse - lb_neg * sum_z - (lb_pos - lb_neg) * z_lab
    validf = valid.astype(jnp.float32)
    loss = jnp.where(valid, loss, 0.0)

    # Fold (1, TP) results into fixed-width (1, acc_w) resident accumulators
    # with aligned, vreg-boundary lane-slice adds (no relayout, bounded VMEM).
    for j in range(tile_pix // acc_w):
        sl = slice(j * acc_w, (j + 1) * acc_w)
        acc_sum[...] += loss[:, sl]
        acc_cnt[...] += validf[:, sl]

    @pl.when(t == pl.num_programs(2) - 1)
    def _():
        s_tot = jnp.sum(acc_sum[...])
        c_tot = jnp.sum(acc_cnt[...])
        row = jax.lax.broadcasted_iota(jnp.int32, out_ref.shape, 2)
        out_ref[...] = jnp.where(row == 0, s_tot, c_tot)   # row0=sum, row1=count


def _vmem_capacity_bytes():
    try:
        info = pltpu.get_tpu_info()
        cap = getattr(info, "vmem_capacity_bytes", None)
        if cap:
            return int(cap)
    except Exception:
        pass
    return 128 * 1024 * 1024


def label_smooth_softmax_ce(logits, label, *, lb_smooth=0.1, ignore_index=-100,
                            reduction='mean', _max_tile_pix=None):
    """logits: (N, C, H, W) any float dtype; label: (N, H, W) int.

    Returns scalar f32 (reduction 'mean' or 'sum').
    """
    N, C, H, W = logits.shape
    HW = H * W
    lb_pos = 1.0 - lb_smooth
    lb_neg = lb_smooth / C

    # Free reshapes only — keep native dtype/layout in HBM.
    x = logits.reshape(N, C, HW)
    if label.dtype != jnp.int32:
        # TODO(synk): in-kernel cast of narrow int label dtypes to skip this pass.
        label = label.astype(jnp.int32)
    lab = label.reshape(N, 1, HW)

    # ---- per-generation tile sizing / VMEM budget -------------------------
    vmem_cap = _vmem_capacity_bytes()
    if vmem_cap <= (80 << 20):                       # v7x-class: 64 MiB per TC
        vmem_limit = min(44 << 20, int(vmem_cap * 0.70))
    else:                                            # v5e / v6e: 128 MiB physical
        vmem_limit = 64 << 20
    ws_budget = int(vmem_limit * 0.70)

    in_bytes = jnp.dtype(logits.dtype).itemsize
    sub_in = {4: 8, 2: 16, 1: 32}.get(in_bytes, 8)
    c_pad_in = -(-C // sub_in) * sub_in              # sublane-padded C (input dtype)
    c_pad_f32 = -(-C // 8) * 8                       # sublane-padded C (f32 temps)
    per_px = (2 * c_pad_in * in_bytes                # double-buffered logits block
              + 2 * 8 * 4                            # double-buffered label block (1->8 sublanes)
              + 4 * c_pad_f32 * 4                    # live f32 (C, TP) temporaries
              + 6 * 8 * 4)                           # live (1, TP) row temporaries
    hw_pad = ((HW + 127) // 128) * 128
    tp = min(ws_budget // per_px, hw_pad, 262144)
    if _max_tile_pix is not None:
        tp = min(tp, _max_tile_pix)
    if HW <= 128:
        tile_pix, acc_w = HW, HW
    elif tp >= _ACC_BASE:
        tile_pix = (tp // _ACC_BASE) * _ACC_BASE
        acc_w = _ACC_BASE
    else:
        tile_pix = max(128, (tp // 128) * 128)
        acc_w = tile_pix
    n_pix_tiles = pl.cdiv(HW, tile_pix)

    # Second parallel axis so both v7x TensorCores work when N is 1.
    n_chunks = 2 if (N == 1 and n_pix_tiles >= 2) else 1
    tiles_per_chunk = pl.cdiv(n_pix_tiles, n_chunks)
    last_blk = n_pix_tiles - 1

    def pix_blk(c, t):
        # Clamp so padded (chunk, tile) combos re-read a real block; their
        # contribution is masked in-kernel via the unclamped column index.
        return jnp.minimum(c * tiles_per_chunk + t, last_blk)

    kernel = functools.partial(
        _ls_ce_kernel, lb_pos=lb_pos, lb_neg=lb_neg, ignore_index=ignore_index,
        hw=HW, tile_pix=tile_pix, tiles_per_chunk=tiles_per_chunk, acc_w=acc_w)

    out = pl.pallas_call(
        kernel,
        out_shape=jax.ShapeDtypeStruct((N, n_chunks, 2, 128), jnp.float32),
        grid_spec=pltpu.PrefetchScalarGridSpec(
            num_scalar_prefetch=0,
            grid=(N, n_chunks, tiles_per_chunk),
            in_specs=[
                pl.BlockSpec((1, C, tile_pix),
                             lambda n, c, t: (n, 0, pix_blk(c, t))),
                pl.BlockSpec((1, 1, tile_pix),
                             lambda n, c, t: (n, 0, pix_blk(c, t))),
            ],
            out_specs=pl.BlockSpec((1, 1, 2, 128),
                                   lambda n, c, t: (n, c, 0, 0)),
            scratch_shapes=[
                pltpu.VMEM((1, acc_w), jnp.float32),   # running loss sum
                pltpu.VMEM((1, acc_w), jnp.float32),   # running valid count
            ],
        ),
        compiler_params=pltpu.CompilerParams(
            dimension_semantics=("parallel", "parallel", "arbitrary"),
            vmem_limit_bytes=int(vmem_limit)),
    )(x, lab)

    total_sum = jnp.sum(out[:, :, 0, 0])
    total_cnt = jnp.sum(out[:, :, 1, 0])
    if reduction == 'sum':
        return total_sum
    # TODO(synk): reduction='none' (per-pixel loss map output) not implemented.
    # 'mean': deviates from PyTorch when ALL pixels are ignored (0.0, not NaN).
    return jnp.where(total_cnt > 0, total_sum / jnp.maximum(total_cnt, 1.0), 0.0)


def _reference(logits, label, *, lb_smooth=0.1, ignore_index=-100):
    """Pure-JAX reference mirroring the PyTorch forward (reduction='mean')."""
    logits = logits.astype(jnp.float32)
    N, C, H, W = logits.shape
    ignore = label == ignore_index
    n_valid = jnp.sum(~ignore)
    lab = jnp.where(ignore, 0, label)
    lb_pos, lb_neg = 1.0 - lb_smooth, lb_smooth / C
    onehot = jax.nn.one_hot(lab, C, axis=1, dtype=jnp.float32)
    target = onehot * lb_pos + (1.0 - onehot) * lb_neg
    logs = jax.nn.log_softmax(logits, axis=1)
    loss = -jnp.sum(logs * target, axis=1)
    loss = jnp.where(ignore, 0.0, loss)
    return jnp.sum(loss) / n_valid.astype(jnp.float32)


if __name__ == "__main__":
    key = jax.random.PRNGKey(0)
    k1, k2, k3, k4, k5, k6 = jax.random.split(key, 6)

    # Case 1: N=2, C=4, 16x16, f32 logits, some ignore_index pixels.
    N, C, H, W = 2, 4, 16, 16
    logits = jax.random.normal(k1, (N, C, H, W), dtype=jnp.float32)
    label = jax.random.randint(k2, (N, H, W), 0, C, dtype=jnp.int32)
    ign = jax.random.uniform(k3, (N, H, W)) < 0.1
    label = jnp.where(ign, -100, label)
    out = jax.block_until_ready(label_smooth_softmax_ce(logits, label))
    ref = _reference(logits, label)
    assert jnp.allclose(out, ref, rtol=1e-5, atol=1e-6), (out, ref)

    # Case 2: N=1 with forced-small pixel tiles -> exercises the chunk-parallel
    # axis (2 chunks x 2 tiles over 3 real tiles, clamped tail) and the
    # in-kernel bf16 -> f32 upcast.
    N2, C2, H2, W2 = 1, 4, 24, 32          # HW = 768 -> 3 tiles of 256
    logits2 = jax.random.normal(k4, (N2, C2, H2, W2), dtype=jnp.float32)
    logits2 = logits2.astype(jnp.bfloat16)
    label2 = jax.random.randint(k5, (N2, H2, W2), 0, C2, dtype=jnp.int32)
    ign2 = jax.random.uniform(k6, (N2, H2, W2)) < 0.1
    label2 = jnp.where(ign2, -100, label2)
    out2 = jax.block_until_ready(
        label_smooth_softmax_ce(logits2, label2, _max_tile_pix=256))
    ref2 = _reference(logits2, label2)
    assert jnp.allclose(out2, ref2, rtol=1e-4, atol=1e-5), (out2, ref2)

    print("KERNEL_OK")
</pallas_src>

<mosaic_0001>
module attributes {stable_mosaic.version = 11 : i64} {
  func.func @_ls_ce_kernel(%arg0: i32, %arg1: i32, %arg2: i32, %arg3: memref<1x4x256xf32, #tpu.memory_space<vmem>>, %arg4: memref<1x1x256xi32, #tpu.memory_space<vmem>>, %arg5: memref<1x1x2x128xf32, #tpu.memory_space<vmem>>, %arg6: memref<1x256xf32, #tpu.memory_space<vmem>>, %arg7: memref<1x256xf32, #tpu.memory_space<vmem>>) attributes {dimension_semantics = [#tpu.dimension_semantics<parallel>, #tpu.dimension_semantics<parallel>, #tpu.dimension_semantics<arbitrary>], iteration_bounds = array<i64: 2, 1, 1>, scalar_prefetch = 0 : i64, scratch_operands = 2 : i64, tpu.core_type = #tpu.core_type<tc>, window_params = [{transform_indices = @transform_0, window_bounds = array<i64: 1, 4, 256>}, {transform_indices = @transform_1, window_bounds = array<i64: 1, 1, 256>}, {transform_indices = @transform_2, window_bounds = array<i64: 1, 1, 2, 128>}]} {
    %c0_i32 = arith.constant 0 : i32
    %0 = arith.cmpi eq, %arg2, %c0_i32 : i32
    %1 = arith.extui %0 : i1 to i32
    %c0_i32_0 = arith.constant 0 : i32
    %2 = arith.cmpi ne, %1, %c0_i32_0 : i32
    scf.if %2 {
      %cst_28 = arith.constant 0.000000e+00 : f32
      %64 = vector.broadcast %cst_28 : f32 to vector<1x256xf32>
      %c0_29 = arith.constant 0 : index
      %c0_30 = arith.constant 0 : index
      %65 = vector.load %arg6[%c0_29, %c0_30] : memref<1x256xf32, #tpu.memory_space<vmem>>, vector<1x256xf32>
      tpu.vector_store %arg6[%c0_29, %c0_30], %64 {strides = array<i32>} : memref<1x256xf32, #tpu.memory_space<vmem>>, vector<1x256xf32>,
      %cst_31 = arith.constant 0.000000e+00 : f32
      %66 = vector.broadcast %cst_31 : f32 to vector<1x256xf32>
      %c0_32 = arith.constant 0 : index
      %c0_33 = arith.constant 0 : index
      %67 = vector.load %arg7[%c0_32, %c0_33] : memref<1x256xf32, #tpu.memory_space<vmem>>, vector<1x256xf32>
      tpu.vector_store %arg7[%c0_32, %c0_33], %66 {strides = array<i32>} : memref<1x256xf32, #tpu.memory_space<vmem>>, vector<1x256xf32>,
    } else {
    }
    %3 = tpu.iota {dimensions = array<i32: 1>} : vector<1x256xi32>
    %c1_i32 = arith.constant 1 : i32
    %4 = arith.muli %arg1, %c1_i32 : i32
    %5 = arith.addi %4, %arg2 : i32
    %c256_i32 = arith.constant 256 : i32
    %6 = arith.muli %5, %c256_i32 : i32
    %7 = vector.broadcast %6 : i32 to vector<1x256xi32>
    %8 = arith.addi %3, %7 : vector<1x256xi32>
    %c256_i32_1 = arith.constant 256 : i32
    %9 = vector.broadcast %c256_i32_1 : i32 to vector<1x256xi32>
    %10 = arith.cmpi slt, %8, %9 : vector<1x256xi32>
    %c0 = arith.constant 0 : index
    %c0_2 = arith.constant 0 : index
    %c0_3 = arith.constant 0 : index
    %11 = vector.load %arg3[%c0, %c0_2, %c0_3] : memref<1x4x256xf32, #tpu.memory_space<vmem>>, vector<1x4x256xf32>
    %12 = vector.shape_cast %11 : vector<1x4x256xf32> to vector<4x256xf32>
    %cst = arith.constant 0.000000e+00 : f32
    %13 = vector.shape_cast %10 : vector<1x256xi1> to vector<1x256xi1>
    %14 = vector.broadcast %13 : vector<1x256xi1> to vector<4x256xi1>
    %15 = vector.broadcast %cst : f32 to vector<4x256xf32>
    %16 = arith.select %14, %12, %15 : vector<4x256xi1>, vector<4x256xf32>
    %c0_4 = arith.constant 0 : index
    %c0_5 = arith.constant 0 : index
    %c0_6 = arith.constant 0 : index
    %17 = vector.load %arg4[%c0_4, %c0_5, %c0_6] : memref<1x1x256xi32, #tpu.memory_space<vmem>>, vector<1x1x256xi32>
    %18 = vector.shape_cast %17 : vector<1x1x256xi32> to vector<1x256xi32>
    %c-100_i32 = arith.constant -100 : i32
    %19 = vector.broadcast %c-100_i32 : i32 to vector<1x256xi32>
    %20 = arith.cmpi eq, %18, %19 : vector<1x256xi32>
    %cst_7 = arith.constant dense<true> : vector<1x256xi1>
    %21 = arith.xori %20, %cst_7 : vector<1x256xi1>
    %22 = arith.andi %10, %21 : vector<1x256xi1>
    %c0_i32_8 = arith.constant 0 : i32
    %23 = vector.broadcast %c0_i32_8 : i32 to vector<1x256xi32>
    %24 = arith.select %20, %23, %18 : vector<1x256xi1>, vector<1x256xi32>
    %cst_9 = arith.constant dense<0xFF800000> : vector<256xf32>
    %25 = vector.multi_reduction <maximumf>, %16, %cst_9 [0] : vector<4x256xf32> to vector<256xf32>
    %26 = vector.shape_cast %25 : vector<256xf32> to vector<1x256xf32>
    %27 = vector.broadcast %26 : vector<1x256xf32> to vector<4x256xf32>
    %28 = arith.subf %16, %27 : vector<4x256xf32>
    %29 = math.exp %28 : vector<4x256xf32>
    %cst_10 = arith.constant dense<0.000000e+00> : vector<256xf32>
    %30 = vector.multi_reduction <add>, %29, %cst_10 [0] : vector<4x256xf32> to vector<256xf32>
    %31 = vector.shape_cast %30 : vector<256xf32> to vector<1x256xf32>
    %32 = math.log %31 : vector<1x256xf32>
    %cst_11 = arith.constant dense<0.000000e+00> : vector<256xf32>
    %33 = vector.multi_reduction <add>, %28, %cst_11 [0] : vector<4x256xf32> to vector<256xf32>
    %34 = vector.shape_cast %33 : vector<256xf32> to vector<1x256xf32>
    %35 = tpu.iota {dimensions = array<i32: 0>} : vector<4x1xi32>
    %36 = vector.broadcast %35 : vector<4x1xi32> to vector<4x256xi32>
    %37 = vector.broadcast %24 : vector<1x256xi32> to vector<4x256xi32>
    %38 = arith.cmpi eq, %36, %37 : vector<4x256xi32>
    %cst_12 = arith.constant 0.000000e+00 : f32
    %39 = vector.broadcast %cst_12 : f32 to vector<4x256xf32>
    %40 = arith.select %38, %28, %39 : vector<4x256xi1>, vector<4x256xf32>
    %cst_13 = arith.constant dense<0.000000e+00> : vector<256xf32>
    %41 = vector.multi_reduction <add>, %40, %cst_13 [0] : vector<4x256xf32> to vector<256xf32>
    %42 = vector.shape_cast %41 : vector<256xf32> to vector<1x256xf32>
    %cst_14 = arith.constant 9.750000e-01 : f32
    %43 = vector.broadcast %cst_14 : f32 to vector<1x256xf32>
    %44 = arith.mulf %43, %32 : vector<1x256xf32>
    %cst_15 = arith.constant 2.500000e-02 : f32
    %45 = vector.broadcast %cst_15 : f32 to vector<1x256xf32>
    %46 = arith.mulf %45, %34 : vector<1x256xf32>
    %47 = arith.subf %44, %46 : vector<1x256xf32>
    %cst_16 = arith.constant 8.750000e-01 : f32
    %48 = vector.broadcast %cst_16 : f32 to vector<1x256xf32>
    %49 = arith.mulf %48, %42 : vector<1x256xf32>
    %50 = arith.subf %47, %49 : vector<1x256xf32>
    %51 = arith.extui %22 : vector<1x256xi1> to vector<1x256xi32>
    %52 = arith.sitofp %51 : vector<1x256xi32> to vector<1x256xf32>
    %cst_17 = arith.constant 0.000000e+00 : f32
    %53 = vector.broadcast %cst_17 : f32 to vector<1x256xf32>
    %54 = arith.select %22, %50, %53 : vector<1x256xi1>, vector<1x256xf32>
    %c0_18 = arith.constant 0 : index
    %c0_19 = arith.constant 0 : index
    %55 = vector.load %arg6[%c0_18, %c0_19] : memref<1x256xf32, #tpu.memory_space<vmem>>, vector<1x256xf32>
    %56 = arith.addf %55, %54 : vector<1x256xf32>
    %c0_20 = arith.constant 0 : index
    %c0_21 = arith.constant 0 : index
    %57 = vector.load %arg6[%c0_20, %c0_21] : memref<1x256xf32, #tpu.memory_space<vmem>>, vector<1x256xf32>
    tpu.vector_store %arg6[%c0_20, %c0_21], %56 {strides = array<i32>} : memref<1x256xf32, #tpu.memory_space<vmem>>, vector<1x256xf32>,
    %c0_22 = arith.constant 0 : index
    %c0_23 = arith.constant 0 : index
    %58 = vector.load %arg7[%c0_22, %c0_23] : memref<1x256xf32, #tpu.memory_space<vmem>>, vector<1x256xf32>
    %59 = arith.addf %58, %52 : vector<1x256xf32>
    %c0_24 = arith.constant 0 : index
    %c0_25 = arith.constant 0 : index
    %60 = vector.load %arg7[%c0_24, %c0_25] : memref<1x256xf32, #tpu.memory_space<vmem>>, vector<1x256xf32>
    tpu.vector_store %arg7[%c0_24, %c0_25], %59 {strides = array<i32>} : memref<1x256xf32, #tpu.memory_space<vmem>>, vector<1x256xf32>,
    %c0_i32_26 = arith.constant 0 : i32
    %61 = arith.cmpi eq, %arg2, %c0_i32_26 : i32
    %62 = arith.extui %61 : i1 to i32
    %c0_i32_27 = arith.constant 0 : i32
    %63 = arith.cmpi ne, %62, %c0_i32_27 : i32
    scf.if %63 {
      %c0_28 = arith.constant 0 : index
      %c0_29 = arith.constant 0 : index
      %64 = vector.load %arg6[%c0_28, %c0_29] : memref<1x256xf32, #tpu.memory_space<vmem>>, vector<1x256xf32>
      %65 = vector.shape_cast %64 : vector<1x256xf32> to vector<1x1x256xf32>
      %cst_30 = arith.constant dense<0.000000e+00> : vector<1xf32>
      %66 = vector.multi_reduction <add>, %65, %cst_30 [1, 2] : vector<1x1x256xf32> to vector<1xf32>
      %67 = vector.shape_cast %66 : vector<1xf32> to vector<1x1x1xf32>
      %68 = vector.extract %67[0, 0, 0] : f32 from vector<1x1x1xf32>
      %c0_31 = arith.constant 0 : index
      %c0_32 = arith.constant 0 : index
      %69 = vector.load %arg7[%c0_31, %c0_32] : memref<1x256xf32, #tpu.memory_space<vmem>>, vector<1x256xf32>
      %70 = vector.shape_cast %69 : vector<1x256xf32> to vector<1x1x256xf32>
      %cst_33 = arith.constant dense<0.000000e+00> : vector<1xf32>
      %71 = vector.multi_reduction <add>, %70, %cst_33 [1, 2] : vector<1x1x256xf32> to vector<1xf32>
      %72 = vector.shape_cast %71 : vector<1xf32> to vector<1x1x1xf32>
      %73 = vector.extract %72[0, 0, 0] : f32 from vector<1x1x1xf32>
      %74 = tpu.iota {dimensions = array<i32: 2>} : vector<1x1x2x128xi32>
      %c0_i32_34 = arith.constant 0 : i32
      %75 = vector.broadcast %c0_i32_34 : i32 to vector<1x1x2x128xi32>
      %76 = arith.cmpi eq, %74, %75 : vector<1x1x2x128xi32>
      %77 = vector.broadcast %68 : f32 to vector<1x1x2x128xf32>
      %78 = vector.broadcast %73 : f32 to vector<1x1x2x128xf32>
      %79 = arith.select %76, %77, %78 : vector<1x1x2x128xi1>, vector<1x1x2x128xf32>
      %c0_35 = arith.constant 0 : index
      %c0_36 = arith.constant 0 : index
      %c0_37 = arith.constant 0 : index
      %c0_38 = arith.constant 0 : index
      %80 = vector.load %arg5[%c0_35, %c0_36, %c0_37, %c0_38] : memref<1x1x2x128xf32, #tpu.memory_space<vmem>>, vector<1x1x2x128xf32>
      tpu.vector_store %arg5[%c0_35, %c0_36, %c0_37, %c0_38], %79 {strides = array<i32>} : memref<1x1x2x128xf32, #tpu.memory_space<vmem>>, vector<1x1x2x128xf32>,
    } else {
    }
    return
  }
  func.func @transform_0(%arg0: i32, %arg1: i32, %arg2: i32) -> (i32, i32, i32) {
    %c1_i32 = arith.constant 1 : i32
    %0 = arith.muli %arg1, %c1_i32 : i32
    %1 = arith.addi %0, %arg2 : i32
    %c0_i32 = arith.constant 0 : i32
    %2 = arith.minsi %1, %c0_i32 : i32
    %c0_i32_0 = arith.constant 0 : i32
    %c0_i32_1 = arith.constant 0 : i32
    return %arg0, %c0_i32_0, %2 : i32, i32, i32
  }
  func.func @transform_1(%arg0: i32, %arg1: i32, %arg2: i32) -> (i32, i32, i32) {
    %c1_i32 = arith.constant 1 : i32
    %0 = arith.muli %arg1, %c1_i32 : i32
    %1 = arith.addi %0, %arg2 : i32
    %c0_i32 = arith.constant 0 : i32
    %2 = arith.minsi %1, %c0_i32 : i32
    %c0_i32_0 = arith.constant 0 : i32
    %c0_i32_1 = arith.constant 0 : i32
    return %arg0, %c0_i32_0, %2 : i32, i32, i32
  }
  func.func @transform_2(%arg0: i32, %arg1: i32, %arg2: i32) -> (i32, i32, i32, i32) {
    %c0_i32 = arith.constant 0 : i32
    %c0_i32_0 = arith.constant 0 : i32
    %c0_i32_1 = arith.constant 0 : i32
    return %arg0, %arg1, %c0_i32, %c0_i32_0 : i32, i32, i32, i32
  }
}

</mosaic_0001>

<llo_original>
// kernel: tpu_custom_call.1
$region0: #{tpu_custom_call.1}
  #allocation0 [shape = 'u32[]', space=smem, size = 0x4, offset = 0x4, fixed_abs, tag = 'smem constant byte address 0x4 - core index']
  #allocation1 [shape = 'u32[144,128]{1,0:T(1,128)}', space=vmem, size = 0x12000, scoped, tag = 'internal scratch']
  #allocation2 [shape = 'f32[1,256]{1,0:T(1,128)}', space=vmem, size = 0x400, scoped, tag = 'scratch operand']
  #allocation3 [shape = 'f32[1,256]{1,0:T(1,128)}', space=vmem, size = 0x400, scoped, tag = 'scratch operand']
  %s0 = inlined_call_operand.hbm [shape: f32[2,4,256], index: 0, kind: input, shape index: {}]
  %s1 = inlined_call_operand.hbm [shape: s32[2,1,256], index: 1, kind: input, shape index: {}]
  %s2 = inlined_call_operand.hbm [shape: f32[2,1,2,128], index: 2, kind: output, shape index: {}]
  %s3 = sld [smem:[#allocation0]]
  $region57: #{tpu_custom_call.1} parent=0
    _
  %s5 = ssub.s32 1, %s3
  %s6 = scalar_select 0, %s5, %s3
  $region1: #{tpu_custom_call.1} parent=0
    #allocation4 [shape = 'u8[8192]{0}', space=vmem, size = 0x2000, scoped, tag = 'input window, operand 0']
    #allocation5 [shape = 's32[2]{0}', space=sflag, size = 0x8, scoped, tag = 'scoped memory for tpu_custom_call.1']
    #allocation6 [shape = 's32[2]{0}', space=sflag, size = 0x8, scoped, tag = 'scoped memory for tpu_custom_call.1']
    #allocation7 [shape = 'u8[2048]{0}', space=vmem, size = 0x800, scoped, tag = 'input window, operand 1']
    #allocation8 [shape = 's32[2]{0}', space=sflag, size = 0x8, scoped, tag = 'scoped memory for tpu_custom_call.1']
    #allocation9 [shape = 'u8[2048]{0}', space=vmem, size = 0x800, scoped, tag = 'output window, operand 0']
    %7 = vsyncpa [#allocation5], 0
    %s8 = scalar_lea.sflag [#allocation5], 1
    %9 = vsyncpa %s8, 0
    %10 = vsyncpa [#allocation8], 0
    %s11 = scalar_lea.sflag [#allocation8], 1
    %12 = vsyncpa %s11, 0
    %13 = vsyncpa [#allocation6], 0
    %s14 = scalar_lea.sflag [#allocation6], 1
    %15 = vsyncpa %s14, 0
    loop: start=0, step=1, limit=4
    $region2: #{tpu_custom_call.1} parent=1 // loop_pre_header
      _
    $region3: #{tpu_custom_call.1} parent=1 // loop_header
      %s17 = sphi 0, %s21
      %p18 = scmp.ge.s32.totalorder %s17, 4
      %s24 = sphi 0, %s43
      %s25 = sphi 0, %s39
      %s26 = sphi 0, %s35
      %s27 = sphi 0, %s24
      %s28 = sphi 0, %s25
      %s29 = sphi 0, %s26
      %s30 = sphi 0, %s27
      %s31 = sphi 0, %s28
      %s32 = sphi 0, %s29
      %s54 = sphi 0, %s56
      %s57 = sphi 0, %s54
      %s58 = sphi 0, %s57
      %s74 = sphi 0, %s58
      %s88 = sphi 0, %s90
      %s91 = sphi 0, %s88
      %s92 = sphi 0, %s91
      %s108 = sphi 0, %s92
      %s116 = sphi 0, %s118
      %s119 = sphi 0, %s116
      %s120 = sphi 0, %s119
      %s136 = sphi 0, %s120
    $region4: #{tpu_custom_call.1} parent=1 // loop_header_branch
      %20 = sbr.rel (%p18) target = $region8
    $region5: #{tpu_custom_call.1} parent=1 // loop_body
      %s22 = ssub.s32 %s17, 1
      %s23 = ssub.s32 %s17, 2
      %s33 = sadd.s32 1, %s26
      %p34 = scmp.ge.s32.totalorder %s33, 1
      %s35 = scalar_select %p34, 0, %s33
      %s36 = sadd.s32 1, %s25
      %s37 = scalar_select %p34, %s36, %s25
      %p38 = scmp.ge.s32.totalorder %s37, 1
      %s39 = scalar_select %p38, 0, %s37
      %s40 = sadd.s32 1, %s24
      %s41 = scalar_select %p38, %s40, %s24
      %p42 = scmp.ge.s32.totalorder %s41, 2
      %s43 = scalar_select %p42, 0, %s41
      %s44 = sadd.s32 %s25, %s26
      %p45 = scmp.lt.s32.totalorder %s44, 0
      %s46 = scalar_select %p45, %s44, 0
      %s47 = sadd.s32 %s39, %s35
      %p48 = scmp.lt.s32.totalorder %s47, 0
      %s49 = scalar_select %p48, %s47, 0
      %s50 = ssub.s32 %s24, %s43
      %s51 = ssub.s32 %s46, %s49
      %s52 = sor.u32 %s50, %s51
      %p53 = scmp.eq.s32.totalorder %s52, 0
      %s55 = sadd.s32 %s54, 1
      %s56 = scalar_select %p53, %s54, %s55
      %p59 = pneg %p53
      %p60 = scmp.eq.s32.totalorder %s17, 1
      %p61 = por %p59, %p60
      %p62 = scmp.ne.s32.totalorder %s54, %s57
      %p63 = scmp.eq.s32.totalorder %s17, 0
      %p64 = por %p62, %p63
      %p65 = scmp.ne.s32.totalorder %s54, %s57
      %p66 = scmp.eq.s32.totalorder %s22, 1
      %p67 = por %p65, %p66
      %p68 = scmp.ne.s32.totalorder %s57, %s58
      %p69 = scmp.eq.s32.totalorder %s22, 0
      %p70 = por %p68, %p69
      %p71 = scmp.ne.s32.totalorder %s57, %s58
      %p72 = scmp.eq.s32.totalorder %s23, 1
      %p73 = por %p71, %p72
      %p75 = scmp.ne.s32.totalorder %s58, %s74
      %p76 = scmp.eq.s32.totalorder %s23, 0
      %p77 = por %p75, %p76
      %s78 = sadd.s32 %s25, %s26
      %p79 = scmp.lt.s32.totalorder %s78, 0
      %s80 = scalar_select %p79, %s78, 0
      %s81 = sadd.s32 %s39, %s35
      %p82 = scmp.lt.s32.totalorder %s81, 0
      %s83 = scalar_select %p82, %s81, 0
      %s84 = ssub.s32 %s24, %s43
      %s85 = ssub.s32 %s80, %s83
      %s86 = sor.u32 %s84, %s85
      %p87 = scmp.eq.s32.totalorder %s86, 0
      %s89 = sadd.s32 %s88, 1
      %s90 = scalar_select %p87, %s88, %s89
      %p93 = pneg %p87
      %p94 = scmp.eq.s32.totalorder %s17, 1
      %p95 = por %p93, %p94
      %p96 = scmp.ne.s32.totalorder %s88, %s91
      %p97 = scmp.eq.s32.totalorder %s17, 0
      %p98 = por %p96, %p97
      %p99 = scmp.ne.s32.totalorder %s88, %s91
      %p100 = scmp.eq.s32.totalorder %s22, 1
      %p101 = por %p99, %p100
      %p102 = scmp.ne.s32.totalorder %s91, %s92
      %p103 = scmp.eq.s32.totalorder %s22, 0
      %p104 = por %p102, %p103
      %p105 = scmp.ne.s32.totalorder %s91, %s92
      %p106 = scmp.eq.s32.totalorder %s23, 1
      %p107 = por %p105, %p106
      %p109 = scmp.ne.s32.totalorder %s92, %s108
      %p110 = scmp.eq.s32.totalorder %s23, 0
      %p111 = por %p109, %p110
      %s112 = ssub.s32 %s24, %s43
      %s113 = ssub.s32 %s25, %s39
      %s114 = sor.u32 %s112, %s113
      %p115 = scmp.eq.s32.totalorder %s114, 0
      %s117 = sadd.s32 %s116, 1
      %s118 = scalar_select %p115, %s116, %s117
      %p121 = pneg %p115
      %p122 = scmp.eq.s32.totalorder %s17, 1
      %p123 = por %p121, %p122
      %p124 = scmp.ne.s32.totalorder %s116, %s119
      %p125 = scmp.eq.s32.totalorder %s17, 0
      %p126 = por %p124, %p125
      %p127 = scmp.ne.s32.totalorder %s116, %s119
      %p128 = scmp.eq.s32.totalorder %s22, 1
      %p129 = por %p127, %p128
      %p130 = scmp.ne.s32.totalorder %s119, %s120
      %p131 = scmp.eq.s32.totalorder %s22, 0
      %p132 = por %p130, %p131
      %p133 = scmp.ne.s32.totalorder %s119, %s120
      %p134 = scmp.eq.s32.totalorder %s23, 1
      %p135 = por %p133, %p134
      %p137 = scmp.ne.s32.totalorder %s120, %s136
      %p138 = scmp.eq.s32.totalorder %s23, 0
      %p139 = por %p137, %p138
      %p140 = scmp.le.s32.totalorder 1, %s17
      %p141 = scmp.lt.s32.totalorder %s17, 3
      %p142 = pnand %p140, %p141
      %p143 = pneg %p142
      // Predicated region
      $region9: #{tpu_custom_call.1} parent=5 // pred_check
        _
      $region10: #{tpu_custom_call.1} parent=5 // pred_check_branch
        %145 = sbr.rel (%p142) target = $region12
      $region11: #{tpu_custom_call.1} parent=5 // pred_region
        %s146 = ssub.s32 %s17, 1
      $region12: #{tpu_custom_call.1} parent=5 // pred_fallthru
        _
      %p147 = scmp.lt.s32.totalorder %s17, 2
      // Predicated region
      $region13: #{tpu_custom_call.1} parent=5 // pred_check
        %p148 = pneg %p147
      $region14: #{tpu_custom_call.1} parent=5 // pred_check_branch
        %150 = sbr.rel (%p148) target = $region16
      $region15: #{tpu_custom_call.1} parent=5 // pred_region
        // Predicated region
        $region17: #{tpu_custom_call.1} parent=15 // pred_check
          %p151 = pneg %p64
        $region18: #{tpu_custom_call.1} parent=15 // pred_check_branch
          %153 = sbr.rel (%p151) target = $region20
        $region19: #{tpu_custom_call.1} parent=15 // pred_region
          %s154 = sand.u32 %s54, 1
          %s155 = scalar_lea.sflag [#allocation5], %s154
          %s156 = sand.u32 %s54, 1
          %s157 = smul.addr %s156, 8
          %s158 = scalar_lea.vmem [#allocation4], %s157
          %s159 = sadd.s32 %s25, %s26
          %p160 = scmp.lt.s32.totalorder %s159, 0
          %s161 = scalar_select %p160, %s159, 0
          %s162 = smul.u32 2, %s161
          %s164 = ssub.s32 128, 128
          %165 = vsyncadd %s155, %s164
          %s166 = smul.addr %s24, 2
          %s167 = sadd.s32 %s162, %s166
          %s168 = smul.addr %s167, 64
          %s169 = scalar_lea.hbm %s0, %s168
          %s171 = sshll.u32 %s158, 4
          %s172 = int_to_ptr.vmem [resolvable:$true] %s171
          %174 = dma.hbm_to_vmem [thread:$0]  %s169, 128, %s172, %s155
        $region20: #{tpu_custom_call.1} parent=15 // pred_fallthru
          _
        // Predicated region
        $region21: #{tpu_custom_call.1} parent=15 // pred_check
          %p175 = pneg %p98
        $region22: #{tpu_custom_call.1} parent=15 // pred_check_branch
          %177 = sbr.rel (%p175) target = $region24
        $region23: #{tpu_custom_call.1} parent=15 // pred_region
          %s178 = sand.u32 %s88, 1
          %s179 = scalar_lea.sflag [#allocation8], %s178
          %s180 = sand.u32 %s88, 1
          %s181 = smul.addr %s180, 2
          %s182 = scalar_lea.vmem [#allocation7], %s181
          %s183 = sadd.s32 %s25, %s26
          %p184 = scmp.lt.s32.totalorder %s183, 0
          %s185 = scalar_select %p184, %s183, 0
          %s186 = smul.u32 2, %s185
          %s188 = ssub.s32 32, 32
          %189 = vsyncadd %s179, %s188
          %s190 = smul.addr %s24, 2
          %s191 = sadd.s32 %s186, %s190
          %s192 = smul.addr %s191, 16
          %s193 = scalar_lea.hbm %s1, %s192
          %s195 = sshll.u32 %s182, 4
          %s196 = int_to_ptr.vmem [resolvable:$true] %s195
          %198 = dma.hbm_to_vmem [thread:$0]  %s193, 32, %s196, %s179
        $region24: #{tpu_custom_call.1} parent=15 // pred_fallthru
          _
      $region16: #{tpu_custom_call.1} parent=5 // pred_fallthru
        _
      %p199 = scmp.le.s32.totalorder 1, %s17
      %p200 = scmp.lt.s32.totalorder %s17, 3
      %p201 = pnand %p199, %p200
      %p202 = pneg %p201
      // Predicated region
      $region25: #{tpu_custom_call.1} parent=5 // pred_check
        _
      $region26: #{tpu_custom_call.1} parent=5 // pred_check_branch
        %204 = sbr.rel (%p201) target = $region28
      $region27: #{tpu_custom_call.1} parent=5 // pred_region
        %s205 = ssub.s32 %s17, 1
        %s206 = sand.u32 %s57, 1
        %s207 = scalar_lea.sflag [#allocation5], %s206
        %s208 = sand.u32 %s57, 1
        %s209 = smul.addr %s208, 8
        %s210 = scalar_lea.vmem [#allocation4], %s209
        // Predicated region
        $region29: #{tpu_custom_call.1} parent=27 // pred_check
          %p211 = pneg %p70
        $region30: #{tpu_custom_call.1} parent=27 // pred_check_branch
          %213 = sbr.rel (%p211) target = $region32
        $region31: #{tpu_custom_call.1} parent=27 // pred_region
          %214 = dma.done %s207, 128
        $region32: #{tpu_custom_call.1} parent=27 // pred_fallthru
          _
        %s215 = sand.u32 %s91, 1
        %s216 = scalar_lea.sflag [#allocation8], %s215
        %s217 = sand.u32 %s91, 1
        %s218 = smul.addr %s217, 2
        %s219 = scalar_lea.vmem [#allocation7], %s218
        // Predicated region
        $region33: #{tpu_custom_call.1} parent=27 // pred_check
          %p220 = pneg %p104
        $region34: #{tpu_custom_call.1} parent=27 // pred_check_branch
          %222 = sbr.rel (%p220) target = $region36
        $region35: #{tpu_custom_call.1} parent=27 // pred_region
          %223 = dma.done %s216, 32
        $region36: #{tpu_custom_call.1} parent=27 // pred_fallthru
          _
        %s224 = sand.u32 %s57, 1
        %s225 = scalar_lea.sflag [#allocation5], %s224
        %s226 = sand.u32 %s57, 1
        %s227 = smul.addr %s226, 8
        %s228 = scalar_lea.vmem [#allocation4], %s227
        %p229 = pneg %p70
        %p230 = pneg %p67
        %s231 = sand.u32 %s91, 1
        %s232 = scalar_lea.sflag [#allocation8], %s231
        %s233 = sand.u32 %s91, 1
        %s234 = smul.addr %s233, 2
        %s235 = scalar_lea.vmem [#allocation7], %s234
        %p236 = pneg %p104
        %p237 = pneg %p101
        %p238 = pneg %p132
        %p239 = pneg %p129
        %s240 = sand.u32 %s119, 1
        %s241 = scalar_lea.sflag [#allocation6], %s240
        %s242 = sand.u32 %s119, 1
        %s243 = smul.addr %s242, 2
        %s244 = scalar_lea.vmem [#allocation9], %s243
        %s245 = sadd.s32 %s28, %s29
        %p246 = scmp.lt.s32.totalorder %s245, 0
        %s247 = scalar_select %p246, %s245, 0
        %s248 = smul.u32 2, %s247
        %s249 = sadd.s32 %s28, %s29
        %p250 = scmp.lt.s32.totalorder %s249, 0
        %s251 = scalar_select %p250, %s249, 0
        %s252 = smul.u32 2, %s251
        %p253 = scmp.eq.s32.totalorder %s29, 0
        // Predicated region
        $region37: #{tpu_custom_call.1} parent=27 // pred_check
          %p254 = pneg %p253
        $region38: #{tpu_custom_call.1} parent=27 // pred_check_branch
          %256 = sbr.rel (%p254) target = $region40
        $region39: #{tpu_custom_call.1} parent=27 // pred_region
          %v257 = vlaneseq
          %vm258 = vcmp.ge.s32.totalorder %v257, 0
          %vm259 = vcmp.lt.s32.totalorder %v257, 256
          %vm260 = vmand %vm258, %vm259
          %261 = vst.msk [vmem:[#allocation2] sm:$0x3] %vm260, 0.0
          %262 = vst.msk [vmem:[#allocation3] sm:$0x3] %vm260, 0.0
        $region40: #{tpu_custom_call.1} parent=27 // pred_fallthru
          _
        %v263 = vlaneseq
        %v264 = vand.u32 %v263, 127
        %v265 = vadd.s32 %v264, 128
        %s266 = sadd.s32 %s28, %s29
        %s267 = smul.u32 %s266, 256
        %v268 = vstv %s267
        %v269 = vadd.s32 %v264, %v268
        %v270 = vadd.s32 %v265, %v268
        %vm271 = vcmp.lt.s32.totalorder %v269, 256
        %vm272 = vcmp.lt.s32.totalorder %v270, 256
        %v273 = vld [vmem:[%s210] sm:$0xff]
        %v274 = vsel %vm271, 1, 0
        %v275 = vsel %vm272, 1, 0
        %vm276 = vcmp.eq.s32.totalorder %v274, 1
        %vm277 = vcmp.eq.s32.totalorder %v275, 1
        %v279 = vcombine.high %v273, %v273
        %v281 = vsel %vm276, %v273, 0.0
        %v282 = vsel %vm277, %v279, 0.0
        %v283 = vld [vmem:[%s219] sm:$0x3]
        %vm284 = vcmp.eq.s32.totalorder %v283, 4294967196
        %vm285 = vmxor %vm284, 1
        %v286 = vsel %vm285, 1, 0
        %v287 = vlaneseq
        %v288 = vshrl.u32 %v287, 7
        %v289 = vsub.s32 0, %v288
        %v290 = vrot.slane %v286, %v289
        %v291 = vlaneseq
        %v292 = vshrl.u32 %v291, 7
        %v293 = vsub.s32 1, %v292
        %v294 = vrot.slane %v286, %v293
        %vm295 = vcmp.ne.s32.totalorder %v290, 0
        %vm296 = vcmp.ne.s32.totalorder %v294, 0
        %vm297 = vmand %vm271, %vm295
        %vm298 = vmand %vm272, %vm296
        %v299 = vsel %vm284, 0, %v283
        %vm300 = vcmask 1043456
        %v301 = vsel %vm300, %v281, -inf
        %v302 = vrot.slane %v301, 4
        %v303 = vmax.f32 %v301, %v302
        %v304 = vrot.slane %v303, 2
        %v305 = vmax.f32 %v303, %v304
        %v306 = vrot.slane %v305, 1
        %v307 = vmax.f32 %v305, %v306
        %v308 = vsel %vm300, %v282, -inf
        %v309 = vrot.slane %v308, 4
        %v310 = vmax.f32 %v308, %v309
        %v311 = vrot.slane %v310, 2
        %v312 = vmax.f32 %v310, %v311
        %v313 = vrot.slane %v312, 1
        %v314 = vmax.f32 %v312, %v313
        %v315 = vsub.f32 %v281, %v307
        %v316 = vsub.f32 %v282, %v314
        %v317 = vmul.f32 %v315, 1.442695
        %v318 = vpow.pop %v317
        %v319 = vmul.f32 %v316, 1.442695
        %v320 = vpow.pop %v319
        %v321 = vsel %vm300, %v318, 0.0
        %v322 = vrot.slane %v321, 4
        %v323 = vadd.f32 %v321, %v322
        %v324 = vrot.slane %v323, 2
        %v325 = vadd.f32 %v323, %v324
        %v326 = vrot.slane %v325, 1
        %v327 = vadd.f32 %v325, %v326
        %v328 = vsel %vm300, %v320, 0.0
        %v329 = vrot.slane %v328, 4
        %v330 = vadd.f32 %v328, %v329
        %v331 = vrot.slane %v330, 2
        %v332 = vadd.f32 %v330, %v331
        %v333 = vrot.slane %v332, 1
        %v334 = vadd.f32 %v332, %v333
        %v335 = vlog2.pop %v327
        %v336 = vmul.f32 %v335, 0.6931472
        %v337 = vlog2.pop %v334
        %v338 = vmul.f32 %v337, 0.6931472
        %v339 = vsel %vm300, %v315, 0.0
        %v340 = vrot.slane %v339, 4
        %v341 = vadd.f32 %v339, %v340
        %v342 = vrot.slane %v341, 2
        %v343 = vadd.f32 %v341, %v342
        %v344 = vrot.slane %v343, 1
        %v345 = vadd.f32 %v343, %v344
        %v346 = vsel %vm300, %v316, 0.0
        %v347 = vrot.slane %v346, 4
        %v348 = vadd.f32 %v346, %v347
        %v349 = vrot.slane %v348, 2
        %v350 = vadd.f32 %v348, %v349
        %v351 = vrot.slane %v350, 1
        %v352 = vadd.f32 %v350, %v351
        %v353 = vlaneseq
        %v354 = vshrl.u32 %v353, 7
        %v355 = vlaneseq
        %v356 = vshrl.u32 %v355, 7
        %v357 = vsub.s32 0, %v356
        %v358 = vrot.slane %v299, %v357
        %v359 = vlaneseq
        %v360 = vshrl.u32 %v359, 7
        %v361 = vsub.s32 1, %v360
        %v362 = vrot.slane %v299, %v361
        %vm363 = vcmp.eq.s32.totalorder %v354, %v358
        %vm364 = vcmp.eq.s32.totalorder %v354, %v362
        %v365 = vsel %vm363, %v315, 0.0
        %v366 = vsel %vm364, %v316, 0.0
        %v367 = vsel %vm300, %v365, 0.0
        %v368 = vrot.slane %v367, 4
        %v369 = vadd.f32 %v367, %v368
        %v370 = vrot.slane %v369, 2
        %v371 = vadd.f32 %v369, %v370
        %v372 = vrot.slane %v371, 1
        %v373 = vadd.f32 %v371, %v372
        %v374 = vsel %vm300, %v366, 0.0
        %v375 = vrot.slane %v374, 4
        %v376 = vadd.f32 %v374, %v375
        %v377 = vrot.slane %v376, 2
        %v378 = vadd.f32 %v376, %v377
        %v379 = vrot.slane %v378, 1
        %v380 = vadd.f32 %v378, %v379
        %v381 = vmul.f32 %v336, 0.975
        %v382 = vmul.f32 %v338, 0.975
        %v383 = vmul.f32 %v345, 0.025
        %v384 = vmul.f32 %v352, 0.025
        %v385 = vsub.f32 %v381, %v383
        %v386 = vsub.f32 %v382, %v384
        %v387 = vmul.f32 %v373, 0.875
        %v388 = vmul.f32 %v380, 0.875
        %v389 = vsub.f32 %v385, %v387
        %v390 = vsub.f32 %v386, %v388
        %v391 = vsel %vm297, 1, 0
        %v392 = vsel %vm298, 1, 0
        %v393 = vcvt.s32.f32 %v391
        %v394 = vcvt.s32.f32 %v392
        %v395 = vsel %vm297, %v389, 0.0
        %v396 = vsel %vm298, %v390, 0.0
        %v397 = vld [vmem:[#allocation2] sm:$0x3]
        %v400 = vcombine.low %v395, %v396
        %v402 = vunpack.c.l.s4 1966171168
        %v403 = vunpack.c.0.s8 %v402
        %v404 = vlaneseq
        %v405 = vshrl.u32 %v404, 7
        %v406 = vsub.s32 %v403, %v405
        %v407 = vrot.slane %v400, %v406
        %v409 = vunpack.c.l.s4 1966171168
        %v410 = vunpack.c.0.s8 %v409
        %v411 = vlaneseq
        %v412 = vshrl.u32 %v411, 7
        %v413 = vsub.s32 %v410, %v412
        %v414 = vrot.slane %v407, %v413
        %v416 = vadd.f32 %v397, %v414
        %v417 = vlaneseq
        %vm418 = vcmp.ge.s32.totalorder %v417, 0
        %vm419 = vcmp.lt.s32.totalorder %v417, 256
        %vm420 = vmand %vm418, %vm419
        %421 = vst.msk [vmem:[#allocation2] sm:$0x3] %vm420, %v416
        %v422 = vld [vmem:[#allocation3] sm:$0x3]
        %v425 = vcombine.low %v393, %v394
        %v427 = vunpack.c.l.s4 1966171168
        %v428 = vunpack.c.0.s8 %v427
        %v429 = vlaneseq
        %v430 = vshrl.u32 %v429, 7
        %v431 = vsub.s32 %v428, %v430
        %v432 = vrot.slane %v425, %v431
        %v434 = vunpack.c.l.s4 1966171168
        %v435 = vunpack.c.0.s8 %v434
        %v436 = vlaneseq
        %v437 = vshrl.u32 %v436, 7
        %v438 = vsub.s32 %v435, %v437
        %v439 = vrot.slane %v432, %v438
        %v441 = vadd.f32 %v422, %v439
        %442 = vst.msk [vmem:[#allocation3] sm:$0x3] %vm420, %v441
        // Predicated region
        $region41: #{tpu_custom_call.1} parent=27 // pred_check
          %p443 = pneg %p253
        $region42: #{tpu_custom_call.1} parent=27 // pred_check_branch
          %445 = sbr.rel (%p443) target = $region44
        $region43: #{tpu_custom_call.1} parent=27 // pred_region
          %v446 = vld [vmem:[#allocation2] sm:$0x3]
          %v448 = vlaneseq
          %v449 = vshrl.u32 %v448, 7
          %v450 = vsub.s32 0, %v449
          %v451 = vrot.slane %v446, %v450
          %v452 = vlaneseq
          %v453 = vshrl.u32 %v452, 7
          %v454 = vsub.s32 1, %v453
          %v455 = vrot.slane %v446, %v454
          %vm458 = vcmask 1040384
          %v459 = vsel %vm458, %v451, 0.0
          %v460 = vsel %vm458, %v455, 0.0
          %v461 = vadd.f32 %v459, %v460
          %462 = vadd.xlane.f32.xlu0 %v461
          %v463 = vpop.xlane.xlu0 %462
          %v464 = vrot.slane %v463, 4
          %v465 = vadd.f32 %v463, %v464
          %v466 = vrot.slane %v465, 2
          %v467 = vadd.f32 %v465, %v466
          %v468 = vrot.slane %v467, 1
          %v469 = vadd.f32 %v467, %v468
          %s470 = vtos %v469
          %v471 = vld [vmem:[#allocation3] sm:$0x3]
          %v473 = vlaneseq
          %v474 = vshrl.u32 %v473, 7
          %v475 = vsub.s32 0, %v474
          %v476 = vrot.slane %v471, %v475
          %v477 = vlaneseq
          %v478 = vshrl.u32 %v477, 7
          %v479 = vsub.s32 1, %v478
          %v480 = vrot.slane %v471, %v479
          %v483 = vsel %vm458, %v476, 0.0
          %v484 = vsel %vm458, %v480, 0.0
          %v485 = vadd.f32 %v483, %v484
          %486 = vadd.xlane.f32.xlu0 %v485
          %v487 = vpop.xlane.xlu0 %486
          %v488 = vrot.slane %v487, 4
          %v489 = vadd.f32 %v487, %v488
          %v490 = vrot.slane %v489, 2
          %v491 = vadd.f32 %v489, %v490
          %v492 = vrot.slane %v491, 1
          %v493 = vadd.f32 %v491, %v492
          %s494 = vtos %v493
          %vm495 = vcmp.eq.s32.totalorder %v354, 0
          %v496 = vstv %s470
          %v497 = vstv %s494
          %v498 = vsel %vm495, %v496, %v497
          %499 = vst [vmem:[%s244] sm:$0x3] %v498
        $region44: #{tpu_custom_call.1} parent=27 // pred_fallthru
          _
        %s500 = sand.u32 %s119, 1
        %s501 = scalar_lea.sflag [#allocation6], %s500
        %s502 = sand.u32 %s119, 1
        %s503 = smul.addr %s502, 2
        %s504 = scalar_lea.vmem [#allocation9], %s503
        // Predicated region
        $region45: #{tpu_custom_call.1} parent=27 // pred_check
          %p505 = pneg %p129
        $region46: #{tpu_custom_call.1} parent=27 // pred_check_branch
          %507 = sbr.rel (%p505) target = $region48
        $region47: #{tpu_custom_call.1} parent=27 // pred_region
          %s509 = ssub.s32 32, 32
          %510 = vsyncadd %s501, %s509
          %s511 = sadd.s32 %s28, %s27
          %s512 = smul.addr %s511, 32
          %s513 = scalar_lea.hbm %s2, %s512
          %s515 = sshll.u32 %s504, 4
          %s516 = int_to_ptr.vmem [resolvable:$true] %s515
          %518 = dma.vmem_to_hbm [thread:$0]  %s516, 32, %s513, %s501
        $region48: #{tpu_custom_call.1} parent=27 // pred_fallthru
          _
      $region28: #{tpu_custom_call.1} parent=5 // pred_fallthru
        _
      %p519 = scmp.le.s32.totalorder 2, %s17
      // Predicated region
      $region49: #{tpu_custom_call.1} parent=5 // pred_check
        %p520 = pneg %p519
      $region50: #{tpu_custom_call.1} parent=5 // pred_check_branch
        %522 = sbr.rel (%p520) target = $region52
      $region51: #{tpu_custom_call.1} parent=5 // pred_region
        %s523 = ssub.s32 %s17, 2
        // Predicated region
        $region53: #{tpu_custom_call.1} parent=51 // pred_check
          %p524 = pneg %p135
        $region54: #{tpu_custom_call.1} parent=51 // pred_check_branch
          %526 = sbr.rel (%p524) target = $region56
        $region55: #{tpu_custom_call.1} parent=51 // pred_region
          %s527 = sand.u32 %s120, 1
          %s528 = scalar_lea.sflag [#allocation6], %s527
          %s529 = sand.u32 %s120, 1
          %s530 = smul.addr %s529, 2
          %s531 = scalar_lea.vmem [#allocation9], %s530
          %532 = dma.done %s528, 32
        $region56: #{tpu_custom_call.1} parent=51 // pred_fallthru
          _
      $region52: #{tpu_custom_call.1} parent=5 // pred_fallthru
        _
    $region6: #{tpu_custom_call.1} parent=1 // loop_footer
      %s21 = sadd.s32 1, %s17
    $region7: #{tpu_custom_call.1} parent=1 // loop_footer_branch
      %16 = sbr.rel target = $region3
    $region8: #{tpu_custom_call.1} parent=1 // loop_exit
      _
    %533 = vsyncpa [#allocation5], 1
    %s534 = scalar_lea.sflag [#allocation5], 1
    %535 = vsyncpa %s534, 1
    %536 = vsyncpa [#allocation8], 1
    %s537 = scalar_lea.sflag [#allocation8], 1
    %538 = vsyncpa %s537, 1
    %539 = vsyncpa [#allocation6], 1
    %s540 = scalar_lea.sflag [#allocation6], 1
    %541 = vsyncpa %s540, 1

</llo_original>
